<compile_context>
chip_gen: v7x
topology: tpu7x:2x2x1
jax: 0.10.0
libtpu: 0.0.40
codegen_flags: <defaults>
</compile_context>

<pallas_src>
import functools

import numpy as np
import jax
import jax.numpy as jnp
from jax.experimental import pallas as pl
from jax.experimental.pallas import tpu as pltpu


def _round_up(x, m):
    return ((x + m - 1) // m) * m


# ----------------------------- Pallas kernel ------------------------------ #

def _fused_autoencoder_kernel(*refs, relu_flags):
    """Entire encoder+decoder for one batch tile.

    refs = (x_ref, w0, b0, w1, b1, ..., w_{L-1}, b_{L-1}, o_ref)
      x_ref : (TB, D0_pad)        f32  activations (zero-padded)
      w_li  : (Di_pad, Di+1_pad)  bf16 per-layer zero-padded weight, (in, out) layout
      b_li  : (1, Di+1_pad)       f32  per-layer zero-padded bias
      o_ref : (TB, DL_pad)        f32  reconstruction (zero-padded)

    Layer chain is statically unrolled; activations stay in vregs for these dims.
    """
    L = len(relu_flags)
    x_ref = refs[0]
    o_ref = refs[1 + 2 * L]

    h = x_ref[...]                                        # f32 (TB, D0_pad)
    for li, relu in enumerate(relu_flags):                # static unroll over layers
        w = refs[1 + 2 * li][...]                         # bf16 (Din_pad, Dout_pad)
        b = refs[2 + 2 * li][...]                         # f32  (1, Dout_pad)
        y = jnp.dot(h.astype(w.dtype), w,
                    preferred_element_type=jnp.float32)   # MXU, f32 accumulate
        y = y + b                                         # f32 bias add (VPU)
        if relu:
            y = jnp.maximum(y, 0.0)                       # f32 ReLU (VPU)
        h = y
    o_ref[...] = h.astype(o_ref.dtype)


def fused_autoencoder(x_pad, weights, biases, relu_flags, tb):
    """Single pallas_call: batch-tiled grid, per-layer-padded resident weights."""
    B_pad, din_pad = x_pad.shape
    dout_pad = weights[-1].shape[1]
    L = len(weights)
    n_tiles = B_pad // tb

    in_specs = [pl.BlockSpec((tb, din_pad), lambda i: (i, 0))]
    flat_inputs = [x_pad]
    for w, b in zip(weights, biases):
        dwi, dwo = w.shape
        in_specs.append(pl.BlockSpec((dwi, dwo), lambda i: (0, 0)))   # resident weight
        in_specs.append(pl.BlockSpec((1, dwo), lambda i: (0, 0)))     # resident bias
        flat_inputs.append(w)
        flat_inputs.append(b)

    # Cost hint for the XLA scheduler (padded == actually-executed work).
    flops = 2 * B_pad * sum(w.shape[0] * w.shape[1] for w in weights)
    bytes_accessed = (x_pad.size * 4 + B_pad * dout_pad * 4
                      + sum(w.size * 2 for w in weights)
                      + sum(b.size * 4 for b in biases))
    cost = pl.CostEstimate(flops=flops, transcendentals=0,
                           bytes_accessed=bytes_accessed)

    # Explicit scoped-VMEM budget: resident weights/biases + double-buffered I/O tiles
    # + live activations, with generous margin.  Keeps v5e (16 MiB default) happy.
    weight_bytes = sum(w.shape[0] * w.shape[1] * 2 for w in weights)
    bias_bytes = sum(b.shape[1] * 4 for b in biases)
    io_bytes = 2 * tb * din_pad * 4 + 2 * tb * dout_pad * 4
    dmax = max([din_pad] + [w.shape[1] for w in weights])
    act_bytes = 2 * tb * dmax * 4
    vmem_limit = int(min(64 << 20,
                         2 * (weight_bytes + bias_bytes + io_bytes + act_bytes)
                         + (8 << 20)))

    kernel = functools.partial(_fused_autoencoder_kernel,
                               relu_flags=tuple(relu_flags))
    return pl.pallas_call(
        kernel,
        out_shape=jax.ShapeDtypeStruct((B_pad, dout_pad), jnp.float32),
        grid_spec=pltpu.PrefetchScalarGridSpec(
            num_scalar_prefetch=0,
            grid=(n_tiles,),
            in_specs=in_specs,
            out_specs=pl.BlockSpec((tb, dout_pad), lambda i: (i, 0)),
        ),
        compiler_params=pltpu.CompilerParams(
            dimension_semantics=("parallel",),      # batch tiles split across TCs (v7x)
            vmem_limit_bytes=vmem_limit),
        cost_estimate=cost,
    )(*flat_inputs)


# --------------------------- model construction --------------------------- #

def get_layer_dim(input_dim, latent_dim, n_layers, enc_factor):
    """Interpolated layer dims from input_dim down to latent_dim (n_layers+1 entries)."""
    dims = [input_dim]
    for i in range(1, n_layers):
        d = int(round(input_dim / (enc_factor ** i)))
        d = max(d, latent_dim)
        dims.append(d)
    dims.append(latent_dim)
    return dims


def _xavier_uniform(key, shape):
    # shape = (out, in) like torch Linear weight; xavier_uniform bound.
    fan_out, fan_in = shape
    bound = (6.0 / (fan_in + fan_out)) ** 0.5
    return jax.random.uniform(key, shape, jnp.float32, -bound, bound)


def make_params(key, dims):
    """Build [(W_in_out_f32, b_f32)] for a sequence of Linear layers given dims list."""
    params = []
    for i in range(len(dims) - 1):
        key, sub = jax.random.split(key)
        w_oi = _xavier_uniform(sub, (dims[i + 1], dims[i]))    # (out, in) like torch
        b = jnp.full((dims[i + 1],), 0.01, jnp.float32)         # bias.fill_(0.01)
        params.append((w_oi.T, b))                              # stored as (in, out)
    return key, params


def prepare_fused_params(enc_params, dec_params):
    """One-time NumPy prep: per-layer zero-padded bf16 weights + f32 biases."""
    params = list(enc_params) + list(dec_params)
    relu_flags = tuple([True] * (len(enc_params) - 1) + [False]
                       + [True] * (len(dec_params) - 1) + [False])
    dims = [params[0][0].shape[0]] + [w.shape[1] for w, _ in params]
    dims_pad = [_round_up(d, 128) for d in dims]                # per-boundary padding

    weights, biases = [], []
    for li, (w, b) in enumerate(params):
        din, dout = w.shape
        dinp, doutp = dims_pad[li], dims_pad[li + 1]
        wp = np.zeros((dinp, doutp), np.float32)
        wp[:din, :dout] = np.asarray(w)
        bp = np.zeros((1, doutp), np.float32)
        bp[0, :dout] = np.asarray(b)
        # Padded bias entries MUST stay exactly 0 so padded activation columns stay 0
        # through ReLU (otherwise padding silently corrupts downstream layers).
        assert not bp[0, dout:].any(), "non-zero bias in padded region"
        weights.append(jnp.asarray(wp, jnp.bfloat16))
        biases.append(jnp.asarray(bp, jnp.float32))

    return dict(weights=weights, biases=biases, relu_flags=relu_flags,
                din=dims[0], din_pad=dims_pad[0],
                out_dim=dims[-1], out_pad=dims_pad[-1])


def vanillix_forward(x, fused, tb=None):
    """Pad -> single fused Pallas kernel -> slice. Returns (recon, 0, 0)."""
    B, din = x.shape
    din_pad = fused["din_pad"]
    if tb is None:
        # Up to 128 LHS rows per MXU weight pass; small batches round to 8 sublanes.
        tb = 128 if B >= 128 else max(8, _round_up(B, 8))
    b_pad = _round_up(max(B, tb), tb)
    x_pad = jnp.zeros((b_pad, din_pad), jnp.float32).at[:B, :din].set(x)
    y_pad = fused_autoencoder(x_pad, fused["weights"], fused["biases"],
                              fused["relu_flags"], tb)
    recon = y_pad[:B, :fused["out_dim"]]
    # forward returns (recon, torch.tensor(0), torch.tensor(0))
    return recon, jnp.asarray(0), jnp.asarray(0)


def reference_forward(x, enc_params, dec_params):
    """Pure-JAX reference with identical bf16-matmul / f32-accumulate numerics."""
    params = list(enc_params) + list(dec_params)
    relu_flags = ([True] * (len(enc_params) - 1) + [False]
                  + [True] * (len(dec_params) - 1) + [False])
    h = x
    for (w, b), relu in zip(params, relu_flags):
        y = jnp.dot(h.astype(jnp.bfloat16), w.astype(jnp.bfloat16),
                    preferred_element_type=jnp.float32) + b
        h = jnp.maximum(y, 0.0) if relu else y
    return h


# --------------------------------- main ------------------------------------ #

if __name__ == "__main__":
    # Small, forward-consistent shapes.
    batch = 2
    input_dim = 32
    latent_dim = 8
    n_layers = 3          # trial.suggest_int('fc_n_layers', ...)
    enc_factor = 1.5      # trial.suggest_float('encoding_factor', 1, 64)

    enc_dim = get_layer_dim(input_dim, latent_dim, n_layers, enc_factor)
    dec_dim = enc_dim[::-1]

    key = jax.random.PRNGKey(0)
    key, x_key = jax.random.split(key)
    x = jax.random.normal(x_key, (batch, input_dim), jnp.float32)

    key, enc_params = make_params(key, enc_dim)
    key, dec_params = make_params(key, dec_dim)

    fused = prepare_fused_params(enc_params, dec_params)

    recon, z0, z1 = vanillix_forward(x, fused)
    jax.block_until_ready(recon)

    assert recon.shape == (batch, input_dim), recon.shape
    assert recon.dtype == jnp.float32

    # correctness check against pure-JAX reference (same bf16/f32 numerics)
    ref = reference_forward(x, enc_params, dec_params)
    assert jnp.allclose(recon, ref, atol=1e-2, rtol=1e-2), (
        float(jnp.max(jnp.abs(recon - ref))))

    print("KERNEL_OK")
</pallas_src>

<mosaic_0001>
module attributes {stable_mosaic.version = 11 : i64} {
  func.func @_fused_autoencoder_kernel(%arg0: i32, %arg1: memref<8x128xf32, #tpu.memory_space<vmem>>, %arg2: memref<128x128xbf16, #tpu.memory_space<vmem>>, %arg3: memref<1x128xf32, #tpu.memory_space<vmem>>, %arg4: memref<128x128xbf16, #tpu.memory_space<vmem>>, %arg5: memref<1x128xf32, #tpu.memory_space<vmem>>, %arg6: memref<128x128xbf16, #tpu.memory_space<vmem>>, %arg7: memref<1x128xf32, #tpu.memory_space<vmem>>, %arg8: memref<128x128xbf16, #tpu.memory_space<vmem>>, %arg9: memref<1x128xf32, #tpu.memory_space<vmem>>, %arg10: memref<128x128xbf16, #tpu.memory_space<vmem>>, %arg11: memref<1x128xf32, #tpu.memory_space<vmem>>, %arg12: memref<128x128xbf16, #tpu.memory_space<vmem>>, %arg13: memref<1x128xf32, #tpu.memory_space<vmem>>, %arg14: memref<8x128xf32, #tpu.memory_space<vmem>>) attributes {dimension_semantics = [#tpu.dimension_semantics<parallel>], iteration_bounds = array<i64: 1>, scalar_prefetch = 0 : i64, scratch_operands = 0 : i64, tpu.core_type = #tpu.core_type<tc>, window_params = [{transform_indices = @transform_0, window_bounds = array<i64: 8, 128>}, {pipeline_mode = #tpu.pipeline_mode<synchronous>, transform_indices = @transform_1, window_bounds = array<i64: 128, 128>}, {pipeline_mode = #tpu.pipeline_mode<synchronous>, transform_indices = @transform_2, window_bounds = array<i64: 1, 128>}, {pipeline_mode = #tpu.pipeline_mode<synchronous>, transform_indices = @transform_3, window_bounds = array<i64: 128, 128>}, {pipeline_mode = #tpu.pipeline_mode<synchronous>, transform_indices = @transform_4, window_bounds = array<i64: 1, 128>}, {pipeline_mode = #tpu.pipeline_mode<synchronous>, transform_indices = @transform_5, window_bounds = array<i64: 128, 128>}, {pipeline_mode = #tpu.pipeline_mode<synchronous>, transform_indices = @transform_6, window_bounds = array<i64: 1, 128>}, {pipeline_mode = #tpu.pipeline_mode<synchronous>, transform_indices = @transform_7, window_bounds = array<i64: 128, 128>}, {pipeline_mode = #tpu.pipeline_mode<synchronous>, transform_indices = @transform_8, window_bounds = array<i64: 1, 128>}, {pipeline_mode = #tpu.pipeline_mode<synchronous>, transform_indices = @transform_9, window_bounds = array<i64: 128, 128>}, {pipeline_mode = #tpu.pipeline_mode<synchronous>, transform_indices = @transform_10, window_bounds = array<i64: 1, 128>}, {pipeline_mode = #tpu.pipeline_mode<synchronous>, transform_indices = @transform_11, window_bounds = array<i64: 128, 128>}, {pipeline_mode = #tpu.pipeline_mode<synchronous>, transform_indices = @transform_12, window_bounds = array<i64: 1, 128>}, {transform_indices = @transform_13, window_bounds = array<i64: 8, 128>}]} {
    %c0 = arith.constant 0 : index
    %c0_0 = arith.constant 0 : index
    %0 = vector.load %arg1[%c0, %c0_0] : memref<8x128xf32, #tpu.memory_space<vmem>>, vector<8x128xf32>
    %c0_1 = arith.constant 0 : index
    %c0_2 = arith.constant 0 : index
    %1 = vector.load %arg2[%c0_1, %c0_2] : memref<128x128xbf16, #tpu.memory_space<vmem>>, vector<128x128xbf16>
    %c0_3 = arith.constant 0 : index
    %c0_4 = arith.constant 0 : index
    %2 = vector.load %arg3[%c0_3, %c0_4] : memref<1x128xf32, #tpu.memory_space<vmem>>, vector<1x128xf32>
    %3 = arith.truncf %0 : vector<8x128xf32> to vector<8x128xbf16>
    %cst = arith.constant dense<0.000000e+00> : vector<8x128xf32>
    %4 = tpu.matmul %3, %1, %cst {dimension_numbers = #tpu.dot_dimension_numbers<[1], [0], [0], [1], [0, 0, 1, 1], [], []>} : vector<8x128xbf16>, vector<128x128xbf16>, vector<8x128xf32> -> vector<8x128xf32>
    %5 = vector.broadcast %2 : vector<1x128xf32> to vector<8x128xf32>
    %6 = arith.addf %4, %5 : vector<8x128xf32>
    %cst_5 = arith.constant 0.000000e+00 : f32
    %7 = vector.broadcast %cst_5 : f32 to vector<8x128xf32>
    %8 = arith.maximumf %6, %7 : vector<8x128xf32>
    %c0_6 = arith.constant 0 : index
    %c0_7 = arith.constant 0 : index
    %9 = vector.load %arg4[%c0_6, %c0_7] : memref<128x128xbf16, #tpu.memory_space<vmem>>, vector<128x128xbf16>
    %c0_8 = arith.constant 0 : index
    %c0_9 = arith.constant 0 : index
    %10 = vector.load %arg5[%c0_8, %c0_9] : memref<1x128xf32, #tpu.memory_space<vmem>>, vector<1x128xf32>
    %11 = arith.truncf %8 : vector<8x128xf32> to vector<8x128xbf16>
    %cst_10 = arith.constant dense<0.000000e+00> : vector<8x128xf32>
    %12 = tpu.matmul %11, %9, %cst_10 {dimension_numbers = #tpu.dot_dimension_numbers<[1], [0], [0], [1], [0, 0, 1, 1], [], []>} : vector<8x128xbf16>, vector<128x128xbf16>, vector<8x128xf32> -> vector<8x128xf32>
    %13 = vector.broadcast %10 : vector<1x128xf32> to vector<8x128xf32>
    %14 = arith.addf %12, %13 : vector<8x128xf32>
    %cst_11 = arith.constant 0.000000e+00 : f32
    %15 = vector.broadcast %cst_11 : f32 to vector<8x128xf32>
    %16 = arith.maximumf %14, %15 : vector<8x128xf32>
    %c0_12 = arith.constant 0 : index
    %c0_13 = arith.constant 0 : index
    %17 = vector.load %arg6[%c0_12, %c0_13] : memref<128x128xbf16, #tpu.memory_space<vmem>>, vector<128x128xbf16>
    %c0_14 = arith.constant 0 : index
    %c0_15 = arith.constant 0 : index
    %18 = vector.load %arg7[%c0_14, %c0_15] : memref<1x128xf32, #tpu.memory_space<vmem>>, vector<1x128xf32>
    %19 = arith.truncf %16 : vector<8x128xf32> to vector<8x128xbf16>
    %cst_16 = arith.constant dense<0.000000e+00> : vector<8x128xf32>
    %20 = tpu.matmul %19, %17, %cst_16 {dimension_numbers = #tpu.dot_dimension_numbers<[1], [0], [0], [1], [0, 0, 1, 1], [], []>} : vector<8x128xbf16>, vector<128x128xbf16>, vector<8x128xf32> -> vector<8x128xf32>
    %21 = vector.broadcast %18 : vector<1x128xf32> to vector<8x128xf32>
    %22 = arith.addf %20, %21 : vector<8x128xf32>
    %c0_17 = arith.constant 0 : index
    %c0_18 = arith.constant 0 : index
    %23 = vector.load %arg8[%c0_17, %c0_18] : memref<128x128xbf16, #tpu.memory_space<vmem>>, vector<128x128xbf16>
    %c0_19 = arith.constant 0 : index
    %c0_20 = arith.constant 0 : index
    %24 = vector.load %arg9[%c0_19, %c0_20] : memref<1x128xf32, #tpu.memory_space<vmem>>, vector<1x128xf32>
    %25 = arith.truncf %22 : vector<8x128xf32> to vector<8x128xbf16>
    %cst_21 = arith.constant dense<0.000000e+00> : vector<8x128xf32>
    %26 = tpu.matmul %25, %23, %cst_21 {dimension_numbers = #tpu.dot_dimension_numbers<[1], [0], [0], [1], [0, 0, 1, 1], [], []>} : vector<8x128xbf16>, vector<128x128xbf16>, vector<8x128xf32> -> vector<8x128xf32>
    %27 = vector.broadcast %24 : vector<1x128xf32> to vector<8x128xf32>
    %28 = arith.addf %26, %27 : vector<8x128xf32>
    %cst_22 = arith.constant 0.000000e+00 : f32
    %29 = vector.broadcast %cst_22 : f32 to vector<8x128xf32>
    %30 = arith.maximumf %28, %29 : vector<8x128xf32>
    %c0_23 = arith.constant 0 : index
    %c0_24 = arith.constant 0 : index
    %31 = vector.load %arg10[%c0_23, %c0_24] : memref<128x128xbf16, #tpu.memory_space<vmem>>, vector<128x128xbf16>
    %c0_25 = arith.constant 0 : index
    %c0_26 = arith.constant 0 : index
    %32 = vector.load %arg11[%c0_25, %c0_26] : memref<1x128xf32, #tpu.memory_space<vmem>>, vector<1x128xf32>
    %33 = arith.truncf %30 : vector<8x128xf32> to vector<8x128xbf16>
    %cst_27 = arith.constant dense<0.000000e+00> : vector<8x128xf32>
    %34 = tpu.matmul %33, %31, %cst_27 {dimension_numbers = #tpu.dot_dimension_numbers<[1], [0], [0], [1], [0, 0, 1, 1], [], []>} : vector<8x128xbf16>, vector<128x128xbf16>, vector<8x128xf32> -> vector<8x128xf32>
    %35 = vector.broadcast %32 : vector<1x128xf32> to vector<8x128xf32>
    %36 = arith.addf %34, %35 : vector<8x128xf32>
    %cst_28 = arith.constant 0.000000e+00 : f32
    %37 = vector.broadcast %cst_28 : f32 to vector<8x128xf32>
    %38 = arith.maximumf %36, %37 : vector<8x128xf32>
    %c0_29 = arith.constant 0 : index
    %c0_30 = arith.constant 0 : index
    %39 = vector.load %arg12[%c0_29, %c0_30] : memref<128x128xbf16, #tpu.memory_space<vmem>>, vector<128x128xbf16>
    %c0_31 = arith.constant 0 : index
    %c0_32 = arith.constant 0 : index
    %40 = vector.load %arg13[%c0_31, %c0_32] : memref<1x128xf32, #tpu.memory_space<vmem>>, vector<1x128xf32>
    %41 = arith.truncf %38 : vector<8x128xf32> to vector<8x128xbf16>
    %cst_33 = arith.constant dense<0.000000e+00> : vector<8x128xf32>
    %42 = tpu.matmul %41, %39, %cst_33 {dimension_numbers = #tpu.dot_dimension_numbers<[1], [0], [0], [1], [0, 0, 1, 1], [], []>} : vector<8x128xbf16>, vector<128x128xbf16>, vector<8x128xf32> -> vector<8x128xf32>
    %43 = vector.broadcast %40 : vector<1x128xf32> to vector<8x128xf32>
    %44 = arith.addf %42, %43 : vector<8x128xf32>
    %c0_34 = arith.constant 0 : index
    %c0_35 = arith.constant 0 : index
    %45 = vector.load %arg14[%c0_34, %c0_35] : memref<8x128xf32, #tpu.memory_space<vmem>>, vector<8x128xf32>
    tpu.vector_store %arg14[%c0_34, %c0_35], %44 {strides = array<i32>} : memref<8x128xf32, #tpu.memory_space<vmem>>, vector<8x128xf32>,
    return
  }
  func.func @transform_0(%arg0: i32) -> (i32, i32) {
    %c0_i32 = arith.constant 0 : i32
    %c0_i32_0 = arith.constant 0 : i32
    return %arg0, %c0_i32 : i32, i32
  }
  func.func @transform_1(%arg0: i32) -> (i32, i32) {
    %c0_i32 = arith.constant 0 : i32
    %c0_i32_0 = arith.constant 0 : i32
    %c0_i32_1 = arith.constant 0 : i32
    return %c0_i32, %c0_i32_0 : i32, i32
  }
  func.func @transform_2(%arg0: i32) -> (i32, i32) {
    %c0_i32 = arith.constant 0 : i32
    %c0_i32_0 = arith.constant 0 : i32
    %c0_i32_1 = arith.constant 0 : i32
    return %c0_i32, %c0_i32_0 : i32, i32
  }
  func.func @transform_3(%arg0: i32) -> (i32, i32) {
    %c0_i32 = arith.constant 0 : i32
    %c0_i32_0 = arith.constant 0 : i32
    %c0_i32_1 = arith.constant 0 : i32
    return %c0_i32, %c0_i32_0 : i32, i32
  }
  func.func @transform_4(%arg0: i32) -> (i32, i32) {
    %c0_i32 = arith.constant 0 : i32
    %c0_i32_0 = arith.constant 0 : i32
    %c0_i32_1 = arith.constant 0 : i32
    return %c0_i32, %c0_i32_0 : i32, i32
  }
  func.func @transform_5(%arg0: i32) -> (i32, i32) {
    %c0_i32 = arith.constant 0 : i32
    %c0_i32_0 = arith.constant 0 : i32
    %c0_i32_1 = arith.constant 0 : i32
    return %c0_i32, %c0_i32_0 : i32, i32
  }
  func.func @transform_6(%arg0: i32) -> (i32, i32) {
    %c0_i32 = arith.constant 0 : i32
    %c0_i32_0 = arith.constant 0 : i32
    %c0_i32_1 = arith.constant 0 : i32
    return %c0_i32, %c0_i32_0 : i32, i32
  }
  func.func @transform_7(%arg0: i32) -> (i32, i32) {
    %c0_i32 = arith.constant 0 : i32
    %c0_i32_0 = arith.constant 0 : i32
    %c0_i32_1 = arith.constant 0 : i32
    return %c0_i32, %c0_i32_0 : i32, i32
  }
  func.func @transform_8(%arg0: i32) -> (i32, i32) {
    %c0_i32 = arith.constant 0 : i32
    %c0_i32_0 = arith.constant 0 : i32
    %c0_i32_1 = arith.constant 0 : i32
    return %c0_i32, %c0_i32_0 : i32, i32
  }
  func.func @transform_9(%arg0: i32) -> (i32, i32) {
    %c0_i32 = arith.constant 0 : i32
    %c0_i32_0 = arith.constant 0 : i32
    %c0_i32_1 = arith.constant 0 : i32
    return %c0_i32, %c0_i32_0 : i32, i32
  }
  func.func @transform_10(%arg0: i32) -> (i32, i32) {
    %c0_i32 = arith.constant 0 : i32
    %c0_i32_0 = arith.constant 0 : i32
    %c0_i32_1 = arith.constant 0 : i32
    return %c0_i32, %c0_i32_0 : i32, i32
  }
  func.func @transform_11(%arg0: i32) -> (i32, i32) {
    %c0_i32 = arith.constant 0 : i32
    %c0_i32_0 = arith.constant 0 : i32
    %c0_i32_1 = arith.constant 0 : i32
    return %c0_i32, %c0_i32_0 : i32, i32
  }
  func.func @transform_12(%arg0: i32) -> (i32, i32) {
    %c0_i32 = arith.constant 0 : i32
    %c0_i32_0 = arith.constant 0 : i32
    %c0_i32_1 = arith.constant 0 : i32
    return %c0_i32, %c0_i32_0 : i32, i32
  }
  func.func @transform_13(%arg0: i32) -> (i32, i32) {
    %c0_i32 = arith.constant 0 : i32
    %c0_i32_0 = arith.constant 0 : i32
    return %arg0, %c0_i32 : i32, i32
  }
}

</mosaic_0001>

<llo_original>
// kernel: tpu_custom_call.1
$region0: #{tpu_custom_call.1}
  #allocation0 [shape = 'u32[]', space=smem, size = 0x4, offset = 0x4, fixed_abs, tag = 'smem constant byte address 0x4 - core index']
  #allocation1 [shape = 'u32[144,128]{1,0:T(1,128)}', space=vmem, size = 0x12000, scoped, tag = 'internal scratch']
  %s0 = inlined_call_operand.hbm [shape: f32[8,128], index: 0, kind: input, shape index: {}]
  %s1 = inlined_call_operand.hbm [shape: bf16[128,128], index: 1, kind: input, shape index: {}]
  %s2 = inlined_call_operand.vmem [shape: f32[1,128], index: 2, kind: input, shape index: {}]
  %s3 = inlined_call_operand.hbm [shape: bf16[128,128], index: 3, kind: input, shape index: {}]
  %s4 = inlined_call_operand.vmem [shape: f32[1,128], index: 4, kind: input, shape index: {}]
  %s5 = inlined_call_operand.hbm [shape: bf16[128,128], index: 5, kind: input, shape index: {}]
  %s6 = inlined_call_operand.vmem [shape: f32[1,128], index: 6, kind: input, shape index: {}]
  %s7 = inlined_call_operand.hbm [shape: bf16[128,128], index: 7, kind: input, shape index: {}]
  %s8 = inlined_call_operand.vmem [shape: f32[1,128], index: 8, kind: input, shape index: {}]
  %s9 = inlined_call_operand.hbm [shape: bf16[128,128], index: 9, kind: input, shape index: {}]
  %s10 = inlined_call_operand.vmem [shape: f32[1,128], index: 10, kind: input, shape index: {}]
  %s11 = inlined_call_operand.hbm [shape: bf16[128,128], index: 11, kind: input, shape index: {}]
  %s12 = inlined_call_operand.vmem [shape: f32[1,128], index: 12, kind: input, shape index: {}]
  %s13 = inlined_call_operand.hbm [shape: f32[8,128], index: 13, kind: output, shape index: {}]
  %s14 = sld [smem:[#allocation0]]
  $region90: #{tpu_custom_call.1} parent=0
    _
  %s16 = ssub.s32 1, %s14
  %s17 = scalar_select 0, %s16, %s14
  $region1: #{tpu_custom_call.1} parent=0
    #allocation2 [shape = 'u8[4096]{0}', space=vmem, size = 0x1000, scoped, tag = 'input window, operand 0, single buffered']
    #allocation3 [shape = 's32[1]{0}', space=sflag, size = 0x4, scoped, tag = 'scoped memory for tpu_custom_call.1']
    #allocation4 [shape = 's32[1]{0}', space=sflag, size = 0x4, scoped, tag = 'scoped memory for tpu_custom_call.1']
    #allocation5 [shape = 'u8[32768]{0}', space=vmem, size = 0x8000, scoped, tag = 'input window, operand 1, single buffered']
    #allocation6 [shape = 's32[1]{0}', space=sflag, size = 0x4, scoped, tag = 'scoped memory for tpu_custom_call.1']
    #allocation7 [shape = 'u8[32768]{0}', space=vmem, size = 0x8000, scoped, tag = 'input window, operand 3, single buffered']
    #allocation8 [shape = 'u8[32768]{0}', space=vmem, size = 0x8000, scoped, tag = 'input window, operand 5, single buffered']
    #allocation9 [shape = 's32[1]{0}', space=sflag, size = 0x4, scoped, tag = 'scoped memory for tpu_custom_call.1']
    #allocation10 [shape = 'u8[32768]{0}', space=vmem, size = 0x8000, scoped, tag = 'input window, operand 7, single buffered']
    #allocation11 [shape = 'u8[32768]{0}', space=vmem, size = 0x8000, scoped, tag = 'input window, operand 9, single buffered']
    #allocation12 [shape = 's32[1]{0}', space=sflag, size = 0x4, scoped, tag = 'scoped memory for tpu_custom_call.1']
    #allocation13 [shape = 'u8[32768]{0}', space=vmem, size = 0x8000, scoped, tag = 'input window, operand 11, single buffered']
    #allocation14 [shape = 'u8[4096]{0}', space=vmem, size = 0x1000, scoped, tag = 'output window, operand 0, single buffered']
    %18 = vsyncpa [#allocation3], 0
    %19 = vsyncpa [#allocation6], 0
    %20 = vsyncpa [#allocation9], 0
    %21 = vsyncpa [#allocation12], 0
    %22 = vsyncpa [#allocation4], 0
    // Predicated region
    $region2: #{tpu_custom_call.1} parent=1 // pred_check
      _
    $region3: #{tpu_custom_call.1} parent=1 // pred_check_branch
      %24 = sbr.rel (0) target = $region5
    $region4: #{tpu_custom_call.1} parent=1 // pred_region
      %s26 = ssub.s32 128, 128
      %27 = vsyncadd [#allocation3], %s26
      %s29 = sshll.u32 [#allocation2], 4
      %s30 = int_to_ptr.vmem [resolvable:$true] %s29
      %32 = dma.hbm_to_vmem [thread:$0]  %s0, 128, %s30, [#allocation3]
    $region5: #{tpu_custom_call.1} parent=1 // pred_fallthru
      _
    // Predicated region
    $region6: #{tpu_custom_call.1} parent=1 // pred_check
      _
    $region7: #{tpu_custom_call.1} parent=1 // pred_check_branch
      %34 = sbr.rel (0) target = $region9
    $region8: #{tpu_custom_call.1} parent=1 // pred_region
      %s36 = ssub.s32 1024, 1024
      %37 = vsyncadd [#allocation6], %s36
      %s38 = sshll.u32 [#allocation5], 4
      %s39 = int_to_ptr.vmem [resolvable:$true] %s38
      %44 = dma.hbm_to_vmem [thread:$0]  %s1, 1024, %s39, [#allocation6], 64, 64, 4
    $region9: #{tpu_custom_call.1} parent=1 // pred_fallthru
      _
    // Predicated region
    $region10: #{tpu_custom_call.1} parent=1 // pred_check
      _
    $region11: #{tpu_custom_call.1} parent=1 // pred_check_branch
      %46 = sbr.rel (0) target = $region13
    $region12: #{tpu_custom_call.1} parent=1 // pred_region
      _
    $region13: #{tpu_custom_call.1} parent=1 // pred_fallthru
      _
    // Predicated region
    $region14: #{tpu_custom_call.1} parent=1 // pred_check
      _
    $region15: #{tpu_custom_call.1} parent=1 // pred_check_branch
      %48 = sbr.rel (0) target = $region17
    $region16: #{tpu_custom_call.1} parent=1 // pred_region
      %s50 = ssub.s32 1024, 1024
      %51 = vsyncadd [#allocation6], %s50
      %s52 = sshll.u32 [#allocation7], 4
      %s53 = int_to_ptr.vmem [resolvable:$true] %s52
      %58 = dma.hbm_to_vmem [thread:$0]  %s3, 1024, %s53, [#allocation6], 64, 64, 4
    $region17: #{tpu_custom_call.1} parent=1 // pred_fallthru
      _
    // Predicated region
    $region18: #{tpu_custom_call.1} parent=1 // pred_check
      _
    $region19: #{tpu_custom_call.1} parent=1 // pred_check_branch
      %60 = sbr.rel (0) target = $region21
    $region20: #{tpu_custom_call.1} parent=1 // pred_region
      _
    $region21: #{tpu_custom_call.1} parent=1 // pred_fallthru
      _
    // Predicated region
    $region22: #{tpu_custom_call.1} parent=1 // pred_check
      _
    $region23: #{tpu_custom_call.1} parent=1 // pred_check_branch
      %62 = sbr.rel (0) target = $region25
    $region24: #{tpu_custom_call.1} parent=1 // pred_region
      %s64 = ssub.s32 1024, 1024
      %65 = vsyncadd [#allocation9], %s64
      %s66 = sshll.u32 [#allocation8], 4
      %s67 = int_to_ptr.vmem [resolvable:$true] %s66
      %72 = dma.hbm_to_vmem [thread:$0]  %s5, 1024, %s67, [#allocation9], 64, 64, 4
    $region25: #{tpu_custom_call.1} parent=1 // pred_fallthru
      _
    // Predicated region
    $region26: #{tpu_custom_call.1} parent=1 // pred_check
      _
    $region27: #{tpu_custom_call.1} parent=1 // pred_check_branch
      %74 = sbr.rel (0) target = $region29
    $region28: #{tpu_custom_call.1} parent=1 // pred_region
      _
    $region29: #{tpu_custom_call.1} parent=1 // pred_fallthru
      _
    // Predicated region
    $region30: #{tpu_custom_call.1} parent=1 // pred_check
      _
    $region31: #{tpu_custom_call.1} parent=1 // pred_check_branch
      %76 = sbr.rel (0) target = $region33
    $region32: #{tpu_custom_call.1} parent=1 // pred_region
      %s78 = ssub.s32 1024, 1024
      %79 = vsyncadd [#allocation9], %s78
      %s80 = sshll.u32 [#allocation10], 4
      %s81 = int_to_ptr.vmem [resolvable:$true] %s80
      %86 = dma.hbm_to_vmem [thread:$0]  %s7, 1024, %s81, [#allocation9], 64, 64, 4
    $region33: #{tpu_custom_call.1} parent=1 // pred_fallthru
      _
    // Predicated region
    $region34: #{tpu_custom_call.1} parent=1 // pred_check
      _
    $region35: #{tpu_custom_call.1} parent=1 // pred_check_branch
      %88 = sbr.rel (0) target = $region37
    $region36: #{tpu_custom_call.1} parent=1 // pred_region
      _
    $region37: #{tpu_custom_call.1} parent=1 // pred_fallthru
      _
    // Predicated region
    $region38: #{tpu_custom_call.1} parent=1 // pred_check
      _
    $region39: #{tpu_custom_call.1} parent=1 // pred_check_branch
      %90 = sbr.rel (0) target = $region41
    $region40: #{tpu_custom_call.1} parent=1 // pred_region
      %s92 = ssub.s32 1024, 1024
      %93 = vsyncadd [#allocation12], %s92
      %s94 = sshll.u32 [#allocation11], 4
      %s95 = int_to_ptr.vmem [resolvable:$true] %s94
      %100 = dma.hbm_to_vmem [thread:$0]  %s9, 1024, %s95, [#allocation12], 64, 64, 4
    $region41: #{tpu_custom_call.1} parent=1 // pred_fallthru
      _
    // Predicated region
    $region42: #{tpu_custom_call.1} parent=1 // pred_check
      _
    $region43: #{tpu_custom_call.1} parent=1 // pred_check_branch
      %102 = sbr.rel (0) target = $region45
    $region44: #{tpu_custom_call.1} parent=1 // pred_region
      _
    $region45: #{tpu_custom_call.1} parent=1 // pred_fallthru
      _
    // Predicated region
    $region46: #{tpu_custom_call.1} parent=1 // pred_check
      _
    $region47: #{tpu_custom_call.1} parent=1 // pred_check_branch
      %104 = sbr.rel (0) target = $region49
    $region48: #{tpu_custom_call.1} parent=1 // pred_region
      %s106 = ssub.s32 1024, 1024
      %107 = vsyncadd [#allocation12], %s106
      %s108 = sshll.u32 [#allocation13], 4
      %s109 = int_to_ptr.vmem [resolvable:$true] %s108
      %114 = dma.hbm_to_vmem [thread:$0]  %s11, 1024, %s109, [#allocation12], 64, 64, 4
    $region49: #{tpu_custom_call.1} parent=1 // pred_fallthru
      _
    // Predicated region
    $region50: #{tpu_custom_call.1} parent=1 // pred_check
      _
    $region51: #{tpu_custom_call.1} parent=1 // pred_check_branch
      %116 = sbr.rel (0) target = $region53
    $region52: #{tpu_custom_call.1} parent=1 // pred_region
      _
    $region53: #{tpu_custom_call.1} parent=1 // pred_fallthru
      _
    // Predicated region
    $region54: #{tpu_custom_call.1} parent=1 // pred_check
      _
    $region55: #{tpu_custom_call.1} parent=1 // pred_check_branch
      %118 = sbr.rel (0) target = $region57
    $region56: #{tpu_custom_call.1} parent=1 // pred_region
      %119 = dma.done [#allocation3], 128
    $region57: #{tpu_custom_call.1} parent=1 // pred_fallthru
      _
    // Predicated region
    $region58: #{tpu_custom_call.1} parent=1 // pred_check
      _
    $region59: #{tpu_custom_call.1} parent=1 // pred_check_branch
      %121 = sbr.rel (0) target = $region61
    $region60: #{tpu_custom_call.1} parent=1 // pred_region
      %122 = dma.done [#allocation6], 1024
    $region61: #{tpu_custom_call.1} parent=1 // pred_fallthru
      _
    // Predicated region
    $region62: #{tpu_custom_call.1} parent=1 // pred_check
      _
    $region63: #{tpu_custom_call.1} parent=1 // pred_check_branch
      %124 = sbr.rel (0) target = $region65
    $region64: #{tpu_custom_call.1} parent=1 // pred_region
      %125 = dma.done [#allocation6], 1024
    $region65: #{tpu_custom_call.1} parent=1 // pred_fallthru
      _
    // Predicated region
    $region66: #{tpu_custom_call.1} parent=1 // pred_check
      _
    $region67: #{tpu_custom_call.1} parent=1 // pred_check_branch
      %127 = sbr.rel (0) target = $region69
    $region68: #{tpu_custom_call.1} parent=1 // pred_region
      %128 = dma.done [#allocation9], 1024
    $region69: #{tpu_custom_call.1} parent=1 // pred_fallthru
      _
    // Predicated region
    $region70: #{tpu_custom_call.1} parent=1 // pred_check
      _
    $region71: #{tpu_custom_call.1} parent=1 // pred_check_branch
      %130 = sbr.rel (0) target = $region73
    $region72: #{tpu_custom_call.1} parent=1 // pred_region
      %131 = dma.done [#allocation9], 1024
    $region73: #{tpu_custom_call.1} parent=1 // pred_fallthru
      _
    // Predicated region
    $region74: #{tpu_custom_call.1} parent=1 // pred_check
      _
    $region75: #{tpu_custom_call.1} parent=1 // pred_check_branch
      %133 = sbr.rel (0) target = $region77
    $region76: #{tpu_custom_call.1} parent=1 // pred_region
      %134 = dma.done [#allocation12], 1024
    $region77: #{tpu_custom_call.1} parent=1 // pred_fallthru
      _
    // Predicated region
    $region78: #{tpu_custom_call.1} parent=1 // pred_check
      _
    $region79: #{tpu_custom_call.1} parent=1 // pred_check_branch
      %136 = sbr.rel (0) target = $region81
    $region80: #{tpu_custom_call.1} parent=1 // pred_region
      %137 = dma.done [#allocation12], 1024
    $region81: #{tpu_custom_call.1} parent=1 // pred_fallthru
      _
    %v139 = vld [vmem:[#allocation2] sm:$0xff]
    %v140 = vld [vmem:[#allocation5] sm:$0xf]
    %v141 = vld [vmem:[#allocation5 + $0x4] sm:$0xf]
    %v142 = vld [vmem:[#allocation5 + $0x8] sm:$0xf]
    %v143 = vld [vmem:[#allocation5 + $0xc] sm:$0xf]
    %v144 = vld [vmem:[#allocation5 + $0x10] sm:$0xf]
    %v145 = vld [vmem:[#allocation5 + $0x14] sm:$0xf]
    %v146 = vld [vmem:[#allocation5 + $0x18] sm:$0xf]
    %v147 = vld [vmem:[#allocation5 + $0x1c] sm:$0xf]
    %v148 = vld [vmem:[#allocation5 + $0x20] sm:$0xf]
    %v149 = vld [vmem:[#allocation5 + $0x24] sm:$0xf]
    %v150 = vld [vmem:[#allocation5 + $0x28] sm:$0xf]
    %v151 = vld [vmem:[#allocation5 + $0x2c] sm:$0xf]
    %v152 = vld [vmem:[#allocation5 + $0x30] sm:$0xf]
    %v153 = vld [vmem:[#allocation5 + $0x34] sm:$0xf]
    %v154 = vld [vmem:[#allocation5 + $0x38] sm:$0xf]
    %v155 = vld [vmem:[#allocation5 + $0x3c] sm:$0xf]
    %v156 = vld [vmem:[%s2] sm:$0x1]
    %v157 = vpack.c.bf16 %v139, %v139
    %v159 = vlaneseq
    %v160 = vshrl.u32 %v159, 7
    %v161 = vsub.s32 0, %v160
    %v162 = vrot.slane %v156, %v161
    %v180 = vunpack.c.l.b16 %v140
    %v181 = vunpack.c.l.b16 %v141
    %v182 = vunpack.c.l.b16 %v142
    %v183 = vunpack.c.l.b16 %v143
    %v184 = vunpack.c.l.b16 %v144
    %v185 = vunpack.c.l.b16 %v145
    %v186 = vunpack.c.l.b16 %v146
    %v187 = vunpack.c.l.b16 %v147
    %v188 = vunpack.c.l.b16 %v148
    %v189 = vunpack.c.l.b16 %v149
    %v190 = vunpack.c.l.b16 %v150
    %v191 = vunpack.c.l.b16 %v151
    %v192 = vunpack.c.l.b16 %v152
    %v193 = vunpack.c.l.b16 %v153
    %v194 = vunpack.c.l.b16 %v154
    %v195 = vunpack.c.l.b16 %v155
    %v196 = vpack.c.b16 %v181, %v180
    %v197 = vpack.c.b16 %v183, %v182
    %v198 = vpack.c.b16 %v185, %v184
    %v199 = vpack.c.b16 %v187, %v186
    %v200 = vpack.c.b16 %v189, %v188
    %v201 = vpack.c.b16 %v191, %v190
    %v202 = vpack.c.b16 %v193, %v192
    %v203 = vpack.c.b16 %v195, %v194
    %212 = vmatprep.subr.bf16.mxu0 0
    %213 = vmatpush1.bf16.msra.mxu0 %v196
    %214 = vmatprep.subr.bf16.mxu0 0
    %215 = vmatpush1.bf16.msra.mxu0 %v197
    %216 = vmatprep.subr.bf16.mxu0 0
    %217 = vmatpush1.bf16.msra.mxu0 %v198
    %218 = vmatprep.subr.bf16.mxu0 0
    %219 = vmatpush1.bf16.msra.mxu0 %v199
    %220 = vmatprep.subr.bf16.mxu0 0
    %221 = vmatpush1.bf16.msra.mxu0 %v200
    %222 = vmatprep.subr.bf16.mxu0 0
    %223 = vmatpush1.bf16.msra.mxu0 %v201
    %224 = vmatprep.subr.bf16.mxu0 0
    %225 = vmatpush1.bf16.msra.mxu0 %v202
    %226 = vmatprep.subr.bf16.mxu0 0
    %227 = vmatpush1.bf16.msra.mxu0 %v203
    %228 = vmatprep.subr.bf16.mxu0 0
    %229 = vmatpush1.bf16.msra.mxu0 0
    %230 = vmatprep.subr.bf16.mxu0 0
    %231 = vmatpush1.bf16.msra.mxu0 0
    %232 = vmatprep.subr.bf16.mxu0 0
    %233 = vmatpush1.bf16.msra.mxu0 0
    %234 = vmatprep.subr.bf16.mxu0 0
    %235 = vmatpush1.bf16.msra.mxu0 0
    %236 = vmatprep.subr.bf16.mxu0 0
    %237 = vmatpush1.bf16.msra.mxu0 0
    %238 = vmatprep.subr.bf16.mxu0 0
    %239 = vmatpush1.bf16.msra.mxu0 0
    %240 = vmatprep.subr.bf16.mxu0 0
    %241 = vmatpush1.bf16.msra.mxu0 0
    %242 = vmatprep.subr.bf16.mxu0 0
    %243 = vmatpush1.bf16.msra.mxu0 0
    %244 = vmatprep.mubr.bf16.mxu0 0
    %245 = vmatmul.mubr.bf16.gmra.mrb[0].mxu0 %v157
    %v246 = vpop.f32.mrb[0].mxu0
    %v247 = vadd.f32 %v162, %v246
    %v248 = vpop.f32.mrb[0].mxu0
    %v249 = vpop.f32.mrb[0].mxu0
    %v250 = vpop.f32.mrb[0].mxu0
    %251 = vdwg.mxu0
    %v252 = vmax.f32 %v247, 0.0
    %v253 = vld [vmem:[#allocation7] sm:$0xf]
    %v254 = vld [vmem:[#allocation7 + $0x4] sm:$0xf]
    %v255 = vld [vmem:[#allocation7 + $0x8] sm:$0xf]
    %v256 = vld [vmem:[#allocation7 + $0xc] sm:$0xf]
    %v257 = vld [vmem:[#allocation7 + $0x10] sm:$0xf]
    %v258 = vld [vmem:[#allocation7 + $0x14] sm:$0xf]
    %v259 = vld [vmem:[#allocation7 + $0x18] sm:$0xf]
    %v260 = vld [vmem:[#allocation7 + $0x1c] sm:$0xf]
    %v261 = vld [vmem:[#allocation7 + $0x20] sm:$0xf]
    %v262 = vld [vmem:[#allocation7 + $0x24] sm:$0xf]
    %v263 = vld [vmem:[#allocation7 + $0x28] sm:$0xf]
    %v264 = vld [vmem:[#allocation7 + $0x2c] sm:$0xf]
    %v265 = vld [vmem:[#allocation7 + $0x30] sm:$0xf]
    %v266 = vld [vmem:[#allocation7 + $0x34] sm:$0xf]
    %v267 = vld [vmem:[#allocation7 + $0x38] sm:$0xf]
    %v268 = vld [vmem:[#allocation7 + $0x3c] sm:$0xf]
    %v269 = vld [vmem:[%s4] sm:$0x1]
    %v270 = vpack.c.bf16 %v252, %v252
    %v272 = vlaneseq
    %v273 = vshrl.u32 %v272, 7
    %v274 = vsub.s32 0, %v273
    %v275 = vrot.slane %v269, %v274
    %v293 = vunpack.c.l.b16 %v253
    %v294 = vunpack.c.l.b16 %v254
    %v295 = vunpack.c.l.b16 %v255
    %v296 = vunpack.c.l.b16 %v256
    %v297 = vunpack.c.l.b16 %v257
    %v298 = vunpack.c.l.b16 %v258
    %v299 = vunpack.c.l.b16 %v259
    %v300 = vunpack.c.l.b16 %v260
    %v301 = vunpack.c.l.b16 %v261
    %v302 = vunpack.c.l.b16 %v262
    %v303 = vunpack.c.l.b16 %v263
    %v304 = vunpack.c.l.b16 %v264
    %v305 = vunpack.c.l.b16 %v265
    %v306 = vunpack.c.l.b16 %v266
    %v307 = vunpack.c.l.b16 %v267
    %v308 = vunpack.c.l.b16 %v268
    %v309 = vpack.c.b16 %v294, %v293
    %v310 = vpack.c.b16 %v296, %v295
    %v311 = vpack.c.b16 %v298, %v297
    %v312 = vpack.c.b16 %v300, %v299
    %v313 = vpack.c.b16 %v302, %v301
    %v314 = vpack.c.b16 %v304, %v303
    %v315 = vpack.c.b16 %v306, %v305
    %v316 = vpack.c.b16 %v308, %v307
    %325 = vmatprep.subr.bf16.mxu0 0
    %326 = vmatpush1.bf16.msra.mxu0 %v309
    %327 = vmatprep.subr.bf16.mxu0 0
    %328 = vmatpush1.bf16.msra.mxu0 %v310
    %329 = vmatprep.subr.bf16.mxu0 0
    %330 = vmatpush1.bf16.msra.mxu0 %v311
    %331 = vmatprep.subr.bf16.mxu0 0
    %332 = vmatpush1.bf16.msra.mxu0 %v312
    %333 = vmatprep.subr.bf16.mxu0 0
    %334 = vmatpush1.bf16.msra.mxu0 %v313
    %335 = vmatprep.subr.bf16.mxu0 0
    %336 = vmatpush1.bf16.msra.mxu0 %v314
    %337 = vmatprep.subr.bf16.mxu0 0
    %338 = vmatpush1.bf16.msra.mxu0 %v315
    %339 = vmatprep.subr.bf16.mxu0 0
    %340 = vmatpush1.bf16.msra.mxu0 %v316
    %341 = vmatprep.subr.bf16.mxu0 0
    %342 = vmatpush1.bf16.msra.mxu0 0
    %343 = vmatprep.subr.bf16.mxu0 0
    %344 = vmatpush1.bf16.msra.mxu0 0
    %345 = vmatprep.subr.bf16.mxu0 0
    %346 = vmatpush1.bf16.msra.mxu0 0
    %347 = vmatprep.subr.bf16.mxu0 0
    %348 = vmatpush1.bf16.msra.mxu0 0
    %349 = vmatprep.subr.bf16.mxu0 0
    %350 = vmatpush1.bf16.msra.mxu0 0
    %351 = vmatprep.subr.bf16.mxu0 0
    %352 = vmatpush1.bf16.msra.mxu0 0
    %353 = vmatprep.subr.bf16.mxu0 0
    %354 = vmatpush1.bf16.msra.mxu0 0
    %355 = vmatprep.subr.bf16.mxu0 0
    %356 = vmatpush1.bf16.msra.mxu0 0
    %357 = vmatprep.mubr.bf16.mxu0 0
    %358 = vmatmul.mubr.bf16.gmra.mrb[0].mxu0 %v270
    %v359 = vpop.f32.mrb[0].mxu0
    %v360 = vadd.f32 %v275, %v359
    %v361 = vpop.f32.mrb[0].mxu0
    %v362 = vpop.f32.mrb[0].mxu0
    %v363 = vpop.f32.mrb[0].mxu0
    %364 = vdwg.mxu0
    %v365 = vmax.f32 %v360, 0.0
    %v366 = vld [vmem:[#allocation8] sm:$0xf]
    %v367 = vld [vmem:[#allocation8 + $0x4] sm:$0xf]
    %v368 = vld [vmem:[#allocation8 + $0x8] sm:$0xf]
    %v369 = vld [vmem:[#allocation8 + $0xc] sm:$0xf]
    %v370 = vld [vmem:[#allocation8 + $0x10] sm:$0xf]
    %v371 = vld [vmem:[#allocation8 + $0x14] sm:$0xf]
    %v372 = vld [vmem:[#allocation8 + $0x18] sm:$0xf]
    %v373 = vld [vmem:[#allocation8 + $0x1c] sm:$0xf]
    %v374 = vld [vmem:[#allocation8 + $0x20] sm:$0xf]
    %v375 = vld [vmem:[#allocation8 + $0x24] sm:$0xf]
    %v376 = vld [vmem:[#allocation8 + $0x28] sm:$0xf]
    %v377 = vld [vmem:[#allocation8 + $0x2c] sm:$0xf]
    %v378 = vld [vmem:[#allocation8 + $0x30] sm:$0xf]
    %v379 = vld [vmem:[#allocation8 + $0x34] sm:$0xf]
    %v380 = vld [vmem:[#allocation8 + $0x38] sm:$0xf]
    %v381 = vld [vmem:[#allocation8 + $0x3c] sm:$0xf]
    %v382 = vld [vmem:[%s6] sm:$0x1]
    %v383 = vpack.c.bf16 %v365, %v365
    %v385 = vlaneseq
    %v386 = vshrl.u32 %v385, 7
    %v387 = vsub.s32 0, %v386
    %v388 = vrot.slane %v382, %v387
    %v406 = vunpack.c.l.b16 %v366
    %v407 = vunpack.c.l.b16 %v367
    %v408 = vunpack.c.l.b16 %v368
    %v409 = vunpack.c.l.b16 %v369
    %v410 = vunpack.c.l.b16 %v370
    %v411 = vunpack.c.l.b16 %v371
    %v412 = vunpack.c.l.b16 %v372
    %v413 = vunpack.c.l.b16 %v373
    %v414 = vunpack.c.l.b16 %v374
    %v415 = vunpack.c.l.b16 %v375
    %v416 = vunpack.c.l.b16 %v376
    %v417 = vunpack.c.l.b16 %v377
    %v418 = vunpack.c.l.b16 %v378
    %v419 = vunpack.c.l.b16 %v379
    %v420 = vunpack.c.l.b16 %v380
    %v421 = vunpack.c.l.b16 %v381
    %v422 = vpack.c.b16 %v407, %v406
    %v423 = vpack.c.b16 %v409, %v408
    %v424 = vpack.c.b16 %v411, %v410
    %v425 = vpack.c.b16 %v413, %v412
    %v426 = vpack.c.b16 %v415, %v414
    %v427 = vpack.c.b16 %v417, %v416
    %v428 = vpack.c.b16 %v419, %v418
    %v429 = vpack.c.b16 %v421, %v420
    %438 = vmatprep.subr.bf16.mxu0 0
    %439 = vmatpush1.bf16.msra.mxu0 %v422
    %440 = vmatprep.subr.bf16.mxu0 0
    %441 = vmatpush1.bf16.msra.mxu0 %v423
    %442 = vmatprep.subr.bf16.mxu0 0
    %443 = vmatpush1.bf16.msra.mxu0 %v424
    %444 = vmatprep.subr.bf16.mxu0 0
    %445 = vmatpush1.bf16.msra.mxu0 %v425
    %446 = vmatprep.subr.bf16.mxu0 0
    %447 = vmatpush1.bf16.msra.mxu0 %v426
    %448 = vmatprep.subr.bf16.mxu0 0
    %449 = vmatpush1.bf16.msra.mxu0 %v427
    %450 = vmatprep.subr.bf16.mxu0 0
    %451 = vmatpush1.bf16.msra.mxu0 %v428
    %452 = vmatprep.subr.bf16.mxu0 0
    %453 = vmatpush1.bf16.msra.mxu0 %v429
    %454 = vmatprep.subr.bf16.mxu0 0
    %455 = vmatpush1.bf16.msra.mxu0 0
    %456 = vmatprep.subr.bf16.mxu0 0
    %457 = vmatpush1.bf16.msra.mxu0 0
    %458 = vmatprep.subr.bf16.mxu0 0
    %459 = vmatpush1.bf16.msra.mxu0 0
    %460 = vmatprep.subr.bf16.mxu0 0
    %461 = vmatpush1.bf16.msra.mxu0 0
    %462 = vmatprep.subr.bf16.mxu0 0
    %463 = vmatpush1.bf16.msra.mxu0 0
    %464 = vmatprep.subr.bf16.mxu0 0
    %465 = vmatpush1.bf16.msra.mxu0 0
    %466 = vmatprep.subr.bf16.mxu0 0
    %467 = vmatpush1.bf16.msra.mxu0 0
    %468 = vmatprep.subr.bf16.mxu0 0
    %469 = vmatpush1.bf16.msra.mxu0 0
    %470 = vmatprep.mubr.bf16.mxu0 0
    %471 = vmatmul.mubr.bf16.gmra.mrb[0].mxu0 %v383
    %v472 = vpop.f32.mrb[0].mxu0
    %v473 = vadd.f32 %v388, %v472
    %v474 = vpop.f32.mrb[0].mxu0
    %v475 = vpop.f32.mrb[0].mxu0
    %v476 = vpop.f32.mrb[0].mxu0
    %477 = vdwg.mxu0
    %v478 = vld [vmem:[#allocation10] sm:$0xf]
    %v479 = vld [vmem:[#allocation10 + $0x4] sm:$0xf]
    %v480 = vld [vmem:[#allocation10 + $0x8] sm:$0xf]
    %v481 = vld [vmem:[#allocation10 + $0xc] sm:$0xf]
    %v482 = vld [vmem:[#allocation10 + $0x10] sm:$0xf]
    %v483 = vld [vmem:[#allocation10 + $0x14] sm:$0xf]
    %v484 = vld [vmem:[#allocation10 + $0x18] sm:$0xf]
    %v485 = vld [vmem:[#allocation10 + $0x1c] sm:$0xf]
    %v486 = vld [vmem:[#allocation10 + $0x20] sm:$0xf]
    %v487 = vld [vmem:[#allocation10 + $0x24] sm:$0xf]
    %v488 = vld [vmem:[#allocation10 + $0x28] sm:$0xf]
    %v489 = vld [vmem:[#allocation10 + $0x2c] sm:$0xf]
    %v490 = vld [vmem:[#allocation10 + $0x30] sm:$0xf]
    %v491 = vld [vmem:[#allocation10 + $0x34] sm:$0xf]
    %v492 = vld [vmem:[#allocation10 + $0x38] sm:$0xf]
    %v493 = vld [vmem:[#allocation10 + $0x3c] sm:$0xf]
    %v494 = vld [vmem:[%s8] sm:$0x1]
    %v495 = vpack.c.bf16 %v473, %v473
    %v497 = vlaneseq
    %v498 = vshrl.u32 %v497, 7
    %v499 = vsub.s32 0, %v498
    %v500 = vrot.slane %v494, %v499
    %v518 = vunpack.c.l.b16 %v478
    %v519 = vunpack.c.l.b16 %v479
    %v520 = vunpack.c.l.b16 %v480
    %v521 = vunpack.c.l.b16 %v481
    %v522 = vunpack.c.l.b16 %v482
    %v523 = vunpack.c.l.b16 %v483
    %v524 = vunpack.c.l.b16 %v484
    %v525 = vunpack.c.l.b16 %v485
    %v526 = vunpack.c.l.b16 %v486
    %v527 = vunpack.c.l.b16 %v487
    %v528 = vunpack.c.l.b16 %v488
    %v529 = vunpack.c.l.b16 %v489
    %v530 = vunpack.c.l.b16 %v490
    %v531 = vunpack.c.l.b16 %v491
    %v532 = vunpack.c.l.b16 %v492
    %v533 = vunpack.c.l.b16 %v493
    %v534 = vpack.c.b16 %v519, %v518
    %v535 = vpack.c.b16 %v521, %v520
    %v536 = vpack.c.b16 %v523, %v522
    %v537 = vpack.c.b16 %v525, %v524
    %v538 = vpack.c.b16 %v527, %v526
    %v539 = vpack.c.b16 %v529, %v528
    %v540 = vpack.c.b16 %v531, %v530
    %v541 = vpack.c.b16 %v533, %v532
    %550 = vmatprep.subr.bf16.mxu0 0
    %551 = vmatpush1.bf16.msra.mxu0 %v534
    %552 = vmatprep.subr.bf16.mxu0 0
    %553 = vmatpush1.bf16.msra.mxu0 %v535
    %554 = vmatprep.subr.bf16.mxu0 0
    %555 = vmatpush1.bf16.msra.mxu0 %v536
    %556 = vmatprep.subr.bf16.mxu0 0
    %557 = vmatpush1.bf16.msra.mxu0 %v537
    %558 = vmatprep.subr.bf16.mxu0 0
    %559 = vmatpush1.bf16.msra.mxu0 %v538
    %560 = vmatprep.subr.bf16.mxu0 0
    %561 = vmatpush1.bf16.msra.mxu0 %v539
    %562 = vmatprep.subr.bf16.mxu0 0
    %563 = vmatpush1.bf16.msra.mxu0 %v540
    %564 = vmatprep.subr.bf16.mxu0 0
    %565 = vmatpush1.bf16.msra.mxu0 %v541
    %566 = vmatprep.subr.bf16.mxu0 0
    %567 = vmatpush1.bf16.msra.mxu0 0
    %568 = vmatprep.subr.bf16.mxu0 0
    %569 = vmatpush1.bf16.msra.mxu0 0
    %570 = vmatprep.subr.bf16.mxu0 0
    %571 = vmatpush1.bf16.msra.mxu0 0
    %572 = vmatprep.subr.bf16.mxu0 0
    %573 = vmatpush1.bf16.msra.mxu0 0
    %574 = vmatprep.subr.bf16.mxu0 0
    %575 = vmatpush1.bf16.msra.mxu0 0
    %576 = vmatprep.subr.bf16.mxu0 0
    %577 = vmatpush1.bf16.msra.mxu0 0
    %578 = vmatprep.subr.bf16.mxu0 0
    %579 = vmatpush1.bf16.msra.mxu0 0
    %580 = vmatprep.subr.bf16.mxu0 0
    %581 = vmatpush1.bf16.msra.mxu0 0
    %582 = vmatprep.mubr.bf16.mxu0 0
    %583 = vmatmul.mubr.bf16.gmra.mrb[0].mxu0 %v495
    %v584 = vpop.f32.mrb[0].mxu0
    %v585 = vadd.f32 %v500, %v584
    %v586 = vpop.f32.mrb[0].mxu0
    %v587 = vpop.f32.mrb[0].mxu0
    %v588 = vpop.f32.mrb[0].mxu0
    %589 = vdwg.mxu0
    %v590 = vmax.f32 %v585, 0.0
    %v591 = vld [vmem:[#allocation11] sm:$0xf]
    %v592 = vld [vmem:[#allocation11 + $0x4] sm:$0xf]
    %v593 = vld [vmem:[#allocation11 + $0x8] sm:$0xf]
    %v594 = vld [vmem:[#allocation11 + $0xc] sm:$0xf]
    %v595 = vld [vmem:[#allocation11 + $0x10] sm:$0xf]
    %v596 = vld [vmem:[#allocation11 + $0x14] sm:$0xf]
    %v597 = vld [vmem:[#allocation11 + $0x18] sm:$0xf]
    %v598 = vld [vmem:[#allocation11 + $0x1c] sm:$0xf]
    %v599 = vld [vmem:[#allocation11 + $0x20] sm:$0xf]
    %v600 = vld [vmem:[#allocation11 + $0x24] sm:$0xf]
    %v601 = vld [vmem:[#allocation11 + $0x28] sm:$0xf]
    %v602 = vld [vmem:[#allocation11 + $0x2c] sm:$0xf]
    %v603 = vld [vmem:[#allocation11 + $0x30] sm:$0xf]
    %v604 = vld [vmem:[#allocation11 + $0x34] sm:$0xf]
    %v605 = vld [vmem:[#allocation11 + $0x38] sm:$0xf]
    %v606 = vld [vmem:[#allocation11 + $0x3c] sm:$0xf]
    %v607 = vld [vmem:[%s10] sm:$0x1]
    %v608 = vpack.c.bf16 %v590, %v590
    %v610 = vlaneseq
    %v611 = vshrl.u32 %v610, 7
    %v612 = vsub.s32 0, %v611
    %v613 = vrot.slane %v607, %v612
    %v631 = vunpack.c.l.b16 %v591
    %v632 = vunpack.c.l.b16 %v592
    %v633 = vunpack.c.l.b16 %v593
    %v634 = vunpack.c.l.b16 %v594
    %v635 = vunpack.c.l.b16 %v595
    %v636 = vunpack.c.l.b16 %v596
    %v637 = vunpack.c.l.b16 %v597
    %v638 = vunpack.c.l.b16 %v598
    %v639 = vunpack.c.l.b16 %v599
    %v640 = vunpack.c.l.b16 %v600
    %v641 = vunpack.c.l.b16 %v601
    %v642 = vunpack.c.l.b16 %v602
    %v643 = vunpack.c.l.b16 %v603
    %v644 = vunpack.c.l.b16 %v604
    %v645 = vunpack.c.l.b16 %v605
    %v646 = vunpack.c.l.b16 %v606
    %v647 = vpack.c.b16 %v632, %v631
    %v648 = vpack.c.b16 %v634, %v633
    %v649 = vpack.c.b16 %v636, %v635
    %v650 = vpack.c.b16 %v638, %v637
    %v651 = vpack.c.b16 %v640, %v639
    %v652 = vpack.c.b16 %v642, %v641
    %v653 = vpack.c.b16 %v644, %v643
    %v654 = vpack.c.b16 %v646, %v645
    %663 = vmatprep.subr.bf16.mxu0 0
    %664 = vmatpush1.bf16.msra.mxu0 %v647
    %665 = vmatprep.subr.bf16.mxu0 0
    %666 = vmatpush1.bf16.msra.mxu0 %v648
    %667 = vmatprep.subr.bf16.mxu0 0
    %668 = vmatpush1.bf16.msra.mxu0 %v649
    %669 = vmatprep.subr.bf16.mxu0 0
    %670 = vmatpush1.bf16.msra.mxu0 %v650
    %671 = vmatprep.subr.bf16.mxu0 0
    %672 = vmatpush1.bf16.msra.mxu0 %v651
    %673 = vmatprep.subr.bf16.mxu0 0
    %674 = vmatpush1.bf16.msra.mxu0 %v652
    %675 = vmatprep.subr.bf16.mxu0 0
    %676 = vmatpush1.bf16.msra.mxu0 %v653
    %677 = vmatprep.subr.bf16.mxu0 0
    %678 = vmatpush1.bf16.msra.mxu0 %v654
    %679 = vmatprep.subr.bf16.mxu0 0
    %680 = vmatpush1.bf16.msra.mxu0 0
    %681 = vmatprep.subr.bf16.mxu0 0
    %682 = vmatpush1.bf16.msra.mxu0 0
    %683 = vmatprep.subr.bf16.mxu0 0
    %684 = vmatpush1.bf16.msra.mxu0 0
    %685 = vmatprep.subr.bf16.mxu0 0
    %686 = vmatpush1.bf16.msra.mxu0 0
    %687 = vmatprep.subr.bf16.mxu0 0
    %688 = vmatpush1.bf16.msra.mxu0 0
    %689 = vmatprep.subr.bf16.mxu0 0
    %690 = vmatpush1.bf16.msra.mxu0 0
    %691 = vmatprep.subr.bf16.mxu0 0
    %692 = vmatpush1.bf16.msra.mxu0 0
    %693 = vmatprep.subr.bf16.mxu0 0
    %694 = vmatpush1.bf16.msra.mxu0 0
    %695 = vmatprep.mubr.bf16.mxu0 0
    %696 = vmatmul.mubr.bf16.gmra.mrb[0].mxu0 %v608
    %v697 = vpop.f32.mrb[0].mxu0
    %v698 = vadd.f32 %v613, %v697
    %v699 = vpop.f32.mrb[0].mxu0
    %v700 = vpop.f32.mrb[0].mxu0
    %v701 = vpop.f32.mrb[0].mxu0
    %702 = vdwg.mxu0
    %v703 = vmax.f32 %v698, 0.0
    %v704 = vld [vmem:[#allocation13] sm:$0xf]
    %v705 = vld [vmem:[#allocation13 + $0x4] sm:$0xf]
    %v706 = vld [vmem:[#allocation13 + $0x8] sm:$0xf]
    %v707 = vld [vmem:[#allocation13 + $0xc] sm:$0xf]
    %v708 = vld [vmem:[#allocation13 + $0x10] sm:$0xf]
    %v709 = vld [vmem:[#allocation13 + $0x14] sm:$0xf]
    %v710 = vld [vmem:[#allocation13 + $0x18] sm:$0xf]
    %v711 = vld [vmem:[#allocation13 + $0x1c] sm:$0xf]
    %v712 = vld [vmem:[#allocation13 + $0x20] sm:$0xf]
    %v713 = vld [vmem:[#allocation13 + $0x24] sm:$0xf]
    %v714 = vld [vmem:[#allocation13 + $0x28] sm:$0xf]
    %v715 = vld [vmem:[#allocation13 + $0x2c] sm:$0xf]
    %v716 = vld [vmem:[#allocation13 + $0x30] sm:$0xf]
    %v717 = vld [vmem:[#allocation13 + $0x34] sm:$0xf]
    %v718 = vld [vmem:[#allocation13 + $0x38] sm:$0xf]
    %v719 = vld [vmem:[#allocation13 + $0x3c] sm:$0xf]
    %v720 = vld [vmem:[%s12] sm:$0x1]
    %v721 = vpack.c.bf16 %v703, %v703
    %v723 = vlaneseq
    %v724 = vshrl.u32 %v723, 7
    %v725 = vsub.s32 0, %v724
    %v726 = vrot.slane %v720, %v725
    %v744 = vunpack.c.l.b16 %v704
    %v745 = vunpack.c.l.b16 %v705
    %v746 = vunpack.c.l.b16 %v706
    %v747 = vunpack.c.l.b16 %v707
    %v748 = vunpack.c.l.b16 %v708
    %v749 = vunpack.c.l.b16 %v709
    %v750 = vunpack.c.l.b16 %v710
    %v751 = vunpack.c.l.b16 %v711
    %v752 = vunpack.c.l.b16 %v712
    %v753 = vunpack.c.l.b16 %v713
    %v754 = vunpack.c.l.b16 %v714
    %v755 = vunpack.c.l.b16 %v715
    %v756 = vunpack.c.l.b16 %v716
    %v757 = vunpack.c.l.b16 %v717
    %v758 = vunpack.c.l.b16 %v718
    %v759 = vunpack.c.l.b16 %v719
    %v760 = vpack.c.b16 %v745, %v744
    %v761 = vpack.c.b16 %v747, %v746
    %v762 = vpack.c.b16 %v749, %v748
    %v763 = vpack.c.b16 %v751, %v750
    %v764 = vpack.c.b16 %v753, %v752
    %v765 = vpack.c.b16 %v755, %v754
    %v766 = vpack.c.b16 %v757, %v756
    %v767 = vpack.c.b16 %v759, %v758
    %776 = vmatprep.subr.bf16.mxu0 0
    %777 = vmatpush1.bf16.msra.mxu0 %v760
    %778 = vmatprep.subr.bf16.mxu0 0
    %779 = vmatpush1.bf16.msra.mxu0 %v761
    %780 = vmatprep.subr.bf16.mxu0 0
    %781 = vmatpush1.bf16.msra.mxu0 %v762
    %782 = vmatprep.subr.bf16.mxu0 0
    %783 = vmatpush1.bf16.msra.mxu0 %v763
    %784 = vmatprep.subr.bf16.mxu0 0
    %785 = vmatpush1.bf16.msra.mxu0 %v764
    %786 = vmatprep.subr.bf16.mxu0 0
    %787 = vmatpush1.bf16.msra.mxu0 %v765
    %788 = vmatprep.subr.bf16.mxu0 0
    %789 = vmatpush1.bf16.msra.mxu0 %v766
    %790 = vmatprep.subr.bf16.mxu0 0
    %791 = vmatpush1.bf16.msra.mxu0 %v767
    %792 = vmatprep.subr.bf16.mxu0 0
    %793 = vmatpush1.bf16.msra.mxu0 0
    %794 = vmatprep.subr.bf16.mxu0 0
    %795 = vmatpush1.bf16.msra.mxu0 0
    %796 = vmatprep.subr.bf16.mxu0 0
    %797 = vmatpush1.bf16.msra.mxu0 0
    %798 = vmatprep.subr.bf16.mxu0 0
    %799 = vmatpush1.bf16.msra.mxu0 0
    %800 = vmatprep.subr.bf16.mxu0 0
    %801 = vmatpush1.bf16.msra.mxu0 0
    %802 = vmatprep.subr.bf16.mxu0 0
    %803 = vmatpush1.bf16.msra.mxu0 0
    %804 = vmatprep.subr.bf16.mxu0 0
    %805 = vmatpush1.bf16.msra.mxu0 0
    %806 = vmatprep.subr.bf16.mxu0 0
    %807 = vmatpush1.bf16.msra.mxu0 0
    %808 = vmatprep.mubr.bf16.mxu0 0
    %809 = vmatmul.mubr.bf16.gmra.mrb[0].mxu0 %v721
    %v810 = vpop.f32.mrb[0].mxu0
    %v811 = vadd.f32 %v726, %v810
    %v812 = vpop.f32.mrb[0].mxu0
    %v813 = vpop.f32.mrb[0].mxu0
    %v814 = vpop.f32.mrb[0].mxu0
    %815 = vdwg.mxu0
    %816 = vst [vmem:[#allocation14] sm:$0xff] %v811
    // Predicated region
    $region82: #{tpu_custom_call.1} parent=1 // pred_check
      _
    $region83: #{tpu_custom_call.1} parent=1 // pred_check_branch
      %818 = sbr.rel (0) target = $region85
    $region84: #{tpu_custom_call.1} parent=1 // pred_region
      %s820 = ssub.s32 128, 128
      %821 = vsyncadd [#allocation4], %s820
      %s823 = sshll.u32 [#allocation14], 4
      %s824 = int_to_ptr.vmem [resolvable:$true] %s823
      %826 = dma.vmem_to_hbm [thread:$0]  %s824, 128, %s13, [#allocation4]
    $region85: #{tpu_custom_call.1} parent=1 // pred_fallthru
      _
    // Predicated region
    $region86: #{tpu_custom_call.1} parent=1 // pred_check
      _
    $region87: #{tpu_custom_call.1} parent=1 // pred_check_branch
      %828 = sbr.rel (0) target = $region89
    $region88: #{tpu_custom_call.1} parent=1 // pred_region
      %829 = dma.done [#allocation4], 128
    $region89: #{tpu_custom_call.1} parent=1 // pred_fallthru
      _
    %830 = vsyncpa [#allocation3], 1
    %831 = vsyncpa [#allocation6], 1
    %832 = vsyncpa [#allocation9], 1
    %833 = vsyncpa [#allocation12], 1
    %834 = vsyncpa [#allocation4], 1

</llo_original>
